<compile_context>
chip_gen: v7x
topology: tpu7x:2x2x1
jax: 0.10.0
libtpu: 0.0.40
codegen_flags: <defaults>
</compile_context>

<pallas_src>
import math

import jax
import jax.numpy as jnp
from jax.experimental import pallas as pl
from jax.experimental.pallas import tpu as pltpu


def _round_up(n, m):
    return ((n + m - 1) // m) * m


def _state_value_kernel(x_ref, w1_ref, b1_ref, w2_ref, b2_ref, o_ref):
    # hidden = relu(x @ W1 + b1): MXU matmul (f32 in, f32 acc) + VPU add/max.
    h = jnp.dot(x_ref[...], w1_ref[...], preferred_element_type=jnp.float32)
    h = jnp.maximum(h + b1_ref[...], 0.0)                   # (TB,128) + (1,128)
    # state_value = hidden @ W2 + b2 done as VPU multiply + XLU lane reduce
    # (degenerate N=1 matmul kept off the MXU).
    o = jnp.sum(h * w2_ref[...], axis=-1, keepdims=True)    # (TB,128)*(1,128) -> (TB,1)
    o = o + b2_ref[0, 0]                                     # scalar bias from SMEM
    o_ref[...] = o.astype(o_ref.dtype)


def prepare_params(w1, b1, w2, b2):
    """One-time weight-side operand prep (hoisted out of the per-call path).

    w1: (obs, 128); b1: (128,); w2: (128, 1); b2: (1,).
    """
    hidden = w1.shape[1]
    return (
        w1.astype(jnp.float32),                        # (obs, hidden) MXU rhs, resident
        b1.reshape(1, hidden).astype(jnp.float32),     # (1, hidden) bias row
        w2.reshape(1, hidden).astype(jnp.float32),     # (1, hidden) row for VPU broadcast
        b2.reshape(1, 1).astype(jnp.float32),          # (1, 1) scalar -> SMEM
    )


def state_value_forward(x, w1, b1_row, w2_row, b2_s, *, block_b=2048):
    """x: (B, obs) f32; remaining args as produced by prepare_params(). Returns (B, 1) f32."""
    B, obs = x.shape
    hidden = w1.shape[1]

    # Batch tile: multiple of 8 sublanes (f32), capped at block_b, chosen so the grid has
    # >= 2 steps whenever B allows it (keeps both v7x TensorCores busy).  TB never exceeds
    # B (for B < 8 the block is the full array), so only the *last* block can be ragged.
    if B <= 8:
        TB = B
    else:
        TB = min(block_b, _round_up(-(-B // 2), 8))
    grid = (pl.cdiv(B, TB),)    # ragged tail handled by Pallas; no host-side padding

    cost = pl.CostEstimate(
        flops=2 * B * obs * hidden + 3 * B * hidden,
        transcendentals=0,
        bytes_accessed=(B * obs + obs * hidden + 2 * hidden + 1 + B) * 4,
    )

    return pl.pallas_call(
        _state_value_kernel,
        out_shape=jax.ShapeDtypeStruct((B, 1), jnp.float32),
        grid=grid,
        in_specs=[
            pl.BlockSpec((TB, obs), lambda i: (i, 0)),           # x: tiled over batch
            pl.BlockSpec((obs, hidden), lambda i: (0, 0)),       # W1: VMEM-resident
            pl.BlockSpec((1, hidden), lambda i: (0, 0)),         # b1 row: resident
            pl.BlockSpec((1, hidden), lambda i: (0, 0)),         # W2 row: resident
            pl.BlockSpec(memory_space=pltpu.MemorySpace.SMEM),   # b2 scalar in SMEM
        ],
        out_specs=pl.BlockSpec((TB, 1), lambda i: (i, 0)),
        compiler_params=pltpu.CompilerParams(
            dimension_semantics=("parallel",),
        ),
        cost_estimate=cost,
    )(x, w1, b1_row, w2_row, b2_s)


def init_params(key, observation_space, hidden=128):
    """Deterministic init mirroring PyTorch nn.Linear default (U[-1/sqrt(fan_in), 1/sqrt(fan_in)])."""
    k1, k2, k3, k4 = jax.random.split(key, 4)
    bound1 = 1.0 / math.sqrt(observation_space)
    bound2 = 1.0 / math.sqrt(hidden)
    w1 = jax.random.uniform(k1, (observation_space, hidden), jnp.float32, -bound1, bound1)
    b1 = jax.random.uniform(k2, (hidden,), jnp.float32, -bound1, bound1)
    w2 = jax.random.uniform(k3, (hidden, 1), jnp.float32, -bound2, bound2)
    b2 = jax.random.uniform(k4, (1,), jnp.float32, -bound2, bound2)
    return w1, b1, w2, b2


def _reference(x, w1, b1, w2, b2):
    h = jnp.maximum(x @ w1 + b1, 0.0)
    return h @ w2 + b2


if __name__ == "__main__":
    key = jax.random.PRNGKey(0)
    k_params, k_x1, k_x2 = jax.random.split(key, 3)

    observation_space = 16
    w1, b1, w2, b2 = init_params(k_params, observation_space)
    params = prepare_params(w1, b1, w2, b2)   # hoisted: done once, reused every call

    # Tiny batch (< 8, not a sublane multiple): single full-array block.
    x_small = jax.random.normal(k_x1, (6, observation_space), jnp.float32)
    out_small = jax.block_until_ready(state_value_forward(x_small, *params))
    ref_small = _reference(x_small, w1, b1, w2, b2)
    assert out_small.shape == (6, 1), out_small.shape
    assert jnp.allclose(out_small, ref_small, atol=1e-2, rtol=1e-2), "mismatch (small batch)"

    # Larger batch, not a multiple of the tile: >= 2 grid steps + ragged last block.
    x_big = jax.random.normal(k_x2, (300, observation_space), jnp.float32)
    out_big = jax.block_until_ready(state_value_forward(x_big, *params))
    ref_big = _reference(x_big, w1, b1, w2, b2)
    assert out_big.shape == (300, 1), out_big.shape
    assert jnp.allclose(out_big, ref_big, atol=1e-2, rtol=1e-2), "mismatch (big batch)"

    print("KERNEL_OK")
</pallas_src>

<mosaic_0001>
module attributes {stable_mosaic.version = 11 : i64} {
  func.func @_state_value_kernel(%arg0: i32, %arg1: memref<6x16xf32, #tpu.memory_space<vmem>>, %arg2: memref<16x128xf32, #tpu.memory_space<vmem>>, %arg3: memref<1x128xf32, #tpu.memory_space<vmem>>, %arg4: memref<1x128xf32, #tpu.memory_space<vmem>>, %arg5: memref<1x1xf32, #tpu.memory_space<smem>>, %arg6: memref<6x1xf32, #tpu.memory_space<vmem>>) attributes {dimension_semantics = [#tpu.dimension_semantics<parallel>], iteration_bounds = array<i64: 1>, scalar_prefetch = 0 : i64, scratch_operands = 0 : i64, tpu.core_type = #tpu.core_type<tc>, window_params = [{transform_indices = @transform_0, window_bounds = array<i64: 6, 16>}, {pipeline_mode = #tpu.pipeline_mode<synchronous>, transform_indices = @transform_1, window_bounds = array<i64: 16, 128>}, {pipeline_mode = #tpu.pipeline_mode<synchronous>, transform_indices = @transform_2, window_bounds = array<i64: 1, 128>}, {pipeline_mode = #tpu.pipeline_mode<synchronous>, transform_indices = @transform_3, window_bounds = array<i64: 1, 128>}, {transform_indices = @transform_4, window_bounds = array<i64: 1, 1>}, {transform_indices = @transform_5, window_bounds = array<i64: 6, 1>}]} {
    %c0 = arith.constant 0 : index
    %c0_0 = arith.constant 0 : index
    %0 = vector.load %arg1[%c0, %c0_0] : memref<6x16xf32, #tpu.memory_space<vmem>>, vector<6x16xf32>
    %c0_1 = arith.constant 0 : index
    %c0_2 = arith.constant 0 : index
    %1 = vector.load %arg2[%c0_1, %c0_2] : memref<16x128xf32, #tpu.memory_space<vmem>>, vector<16x128xf32>
    %cst = arith.constant dense<0.000000e+00> : vector<6x128xf32>
    %2 = tpu.matmul %0, %1, %cst {dimension_numbers = #tpu.dot_dimension_numbers<[1], [0], [0], [1], [0, 0, 1, 1], [], []>} : vector<6x16xf32>, vector<16x128xf32>, vector<6x128xf32> -> vector<6x128xf32>
    %c0_3 = arith.constant 0 : index
    %c0_4 = arith.constant 0 : index
    %3 = vector.load %arg3[%c0_3, %c0_4] : memref<1x128xf32, #tpu.memory_space<vmem>>, vector<1x128xf32>
    %4 = vector.broadcast %3 : vector<1x128xf32> to vector<6x128xf32>
    %5 = arith.addf %2, %4 : vector<6x128xf32>
    %cst_5 = arith.constant 0.000000e+00 : f32
    %6 = vector.broadcast %cst_5 : f32 to vector<6x128xf32>
    %7 = arith.maximumf %5, %6 : vector<6x128xf32>
    %c0_6 = arith.constant 0 : index
    %c0_7 = arith.constant 0 : index
    %8 = vector.load %arg4[%c0_6, %c0_7] : memref<1x128xf32, #tpu.memory_space<vmem>>, vector<1x128xf32>
    %9 = vector.broadcast %8 : vector<1x128xf32> to vector<6x128xf32>
    %10 = arith.mulf %7, %9 : vector<6x128xf32>
    %cst_8 = arith.constant dense<0.000000e+00> : vector<6xf32>
    %11 = vector.multi_reduction <add>, %10, %cst_8 [1] : vector<6x128xf32> to vector<6xf32>
    %12 = vector.shape_cast %11 : vector<6xf32> to vector<6x1xf32>
    %c0_9 = arith.constant 0 : index
    %c0_10 = arith.constant 0 : index
    %13 = memref.load %arg5[%c0_9, %c0_10] : memref<1x1xf32, #tpu.memory_space<smem>>
    %14 = vector.broadcast %13 : f32 to vector<6x1xf32>
    %15 = arith.addf %12, %14 : vector<6x1xf32>
    %c0_11 = arith.constant 0 : index
    %c0_12 = arith.constant 0 : index
    %16 = vector.load %arg6[%c0_11, %c0_12] : memref<6x1xf32, #tpu.memory_space<vmem>>, vector<6x1xf32>
    tpu.vector_store %arg6[%c0_11, %c0_12], %15 {strides = array<i32>} : memref<6x1xf32, #tpu.memory_space<vmem>>, vector<6x1xf32>,
    return
  }
  func.func @transform_0(%arg0: i32) -> (i32, i32) {
    %c0_i32 = arith.constant 0 : i32
    %c0_i32_0 = arith.constant 0 : i32
    return %arg0, %c0_i32 : i32, i32
  }
  func.func @transform_1(%arg0: i32) -> (i32, i32) {
    %c0_i32 = arith.constant 0 : i32
    %c0_i32_0 = arith.constant 0 : i32
    %c0_i32_1 = arith.constant 0 : i32
    return %c0_i32, %c0_i32_0 : i32, i32
  }
  func.func @transform_2(%arg0: i32) -> (i32, i32) {
    %c0_i32 = arith.constant 0 : i32
    %c0_i32_0 = arith.constant 0 : i32
    %c0_i32_1 = arith.constant 0 : i32
    return %c0_i32, %c0_i32_0 : i32, i32
  }
  func.func @transform_3(%arg0: i32) -> (i32, i32) {
    %c0_i32 = arith.constant 0 : i32
    %c0_i32_0 = arith.constant 0 : i32
    %c0_i32_1 = arith.constant 0 : i32
    return %c0_i32, %c0_i32_0 : i32, i32
  }
  func.func @transform_4(%arg0: i32) -> (i32, i32) {
    %c0_i32 = arith.constant 0 : i32
    %c0_i32_0 = arith.constant 0 : i32
    %c0_i32_1 = arith.constant 0 : i32
    return %c0_i32, %c0_i32_0 : i32, i32
  }
  func.func @transform_5(%arg0: i32) -> (i32, i32) {
    %c0_i32 = arith.constant 0 : i32
    %c0_i32_0 = arith.constant 0 : i32
    return %arg0, %c0_i32 : i32, i32
  }
}

</mosaic_0001>

<llo_original>
// kernel: tpu_custom_call.1
$region0: #{tpu_custom_call.1}
  #allocation0 [shape = 'u32[]', space=smem, size = 0x4, offset = 0x4, fixed_abs, tag = 'smem constant byte address 0x4 - core index']
  #allocation1 [shape = 'u32[144,128]{1,0:T(1,128)}', space=vmem, size = 0x12000, scoped, tag = 'internal scratch']
  #allocation2 [shape = 'f32[1,1]{1,0:T(1,128)S(6)}', space=smem, size = 0x200, scoped, tag = 'scoped memory for tpu_custom_call.1']
  %s0 = inlined_call_operand.hbm [shape: f32[6,16], index: 0, kind: input, shape index: {}]
  %s1 = inlined_call_operand.hbm [shape: f32[16,128], index: 1, kind: input, shape index: {}]
  %s2 = inlined_call_operand.vmem [shape: f32[1,128], index: 2, kind: input, shape index: {}]
  %s3 = inlined_call_operand.vmem [shape: f32[1,128], index: 3, kind: input, shape index: {}]
  %s4 = inlined_call_operand.<no memory space> [shape: f32[1,1], index: 4, kind: input, shape index: {}]
  %s5 = inlined_call_operand.vmem [shape: f32[6,1], index: 5, kind: output, shape index: {}]
  %s6 = sld [smem:[#allocation0]]
  $region38: #{tpu_custom_call.1} parent=0
    _
  %s8 = ssub.s32 1, %s6
  %s9 = scalar_select 0, %s8, %s6
  %10 = sst [smem:[#allocation2]] %s4
  $region1: #{tpu_custom_call.1} parent=0
    #allocation3 [shape = 'u8[4096]{0}', space=vmem, size = 0x1000, scoped, tag = 'input window, operand 0, single buffered']
    #allocation4 [shape = 's32[1]{0}', space=sflag, size = 0x4, scoped, tag = 'scoped memory for tpu_custom_call.1']
    #allocation5 [shape = 'u8[8192]{0}', space=vmem, size = 0x2000, scoped, tag = 'input window, operand 1, single buffered']
    #allocation6 [shape = 's32[1]{0}', space=sflag, size = 0x4, scoped, tag = 'scoped memory for tpu_custom_call.1']
    %11 = vsyncpa [#allocation4], 0
    %12 = vsyncpa [#allocation6], 0
    // Predicated region
    $region2: #{tpu_custom_call.1} parent=1 // pred_check
      _
    $region3: #{tpu_custom_call.1} parent=1 // pred_check_branch
      %14 = sbr.rel (0) target = $region5
    $region4: #{tpu_custom_call.1} parent=1 // pred_region
      %s16 = ssub.s32 128, 128
      %17 = vsyncadd [#allocation4], %s16
      %s19 = sshll.u32 [#allocation3], 4
      %s20 = int_to_ptr.vmem [resolvable:$true] %s19
      %22 = dma.hbm_to_vmem [thread:$0]  %s0, 128, %s20, [#allocation4]
    $region5: #{tpu_custom_call.1} parent=1 // pred_fallthru
      _
    // Predicated region
    $region6: #{tpu_custom_call.1} parent=1 // pred_check
      _
    $region7: #{tpu_custom_call.1} parent=1 // pred_check_branch
      %24 = sbr.rel (0) target = $region9
    $region8: #{tpu_custom_call.1} parent=1 // pred_region
      %s26 = ssub.s32 256, 256
      %27 = vsyncadd [#allocation6], %s26
      %s28 = sshll.u32 [#allocation5], 4
      %s29 = int_to_ptr.vmem [resolvable:$true] %s28
      %34 = dma.hbm_to_vmem [thread:$0]  %s1, 256, %s29, [#allocation6], 128, 128, 8
    $region9: #{tpu_custom_call.1} parent=1 // pred_fallthru
      _
    // Predicated region
    $region10: #{tpu_custom_call.1} parent=1 // pred_check
      _
    $region11: #{tpu_custom_call.1} parent=1 // pred_check_branch
      %36 = sbr.rel (0) target = $region13
    $region12: #{tpu_custom_call.1} parent=1 // pred_region
      _
    $region13: #{tpu_custom_call.1} parent=1 // pred_fallthru
      _
    // Predicated region
    $region14: #{tpu_custom_call.1} parent=1 // pred_check
      _
    $region15: #{tpu_custom_call.1} parent=1 // pred_check_branch
      %38 = sbr.rel (0) target = $region17
    $region16: #{tpu_custom_call.1} parent=1 // pred_region
      _
    $region17: #{tpu_custom_call.1} parent=1 // pred_fallthru
      _
    // Predicated region
    $region18: #{tpu_custom_call.1} parent=1 // pred_check
      _
    $region19: #{tpu_custom_call.1} parent=1 // pred_check_branch
      %40 = sbr.rel (0) target = $region21
    $region20: #{tpu_custom_call.1} parent=1 // pred_region
      _
    $region21: #{tpu_custom_call.1} parent=1 // pred_fallthru
      _
    // Predicated region
    $region22: #{tpu_custom_call.1} parent=1 // pred_check
      _
    $region23: #{tpu_custom_call.1} parent=1 // pred_check_branch
      %42 = sbr.rel (0) target = $region25
    $region24: #{tpu_custom_call.1} parent=1 // pred_region
      %43 = dma.done [#allocation4], 128
    $region25: #{tpu_custom_call.1} parent=1 // pred_fallthru
      _
    // Predicated region
    $region26: #{tpu_custom_call.1} parent=1 // pred_check
      _
    $region27: #{tpu_custom_call.1} parent=1 // pred_check_branch
      %45 = sbr.rel (0) target = $region29
    $region28: #{tpu_custom_call.1} parent=1 // pred_region
      %46 = dma.done [#allocation6], 256
    $region29: #{tpu_custom_call.1} parent=1 // pred_fallthru
      _
    %v47 = vld [vmem:[#allocation3] sm:$0x3f]
    %v48 = vld [vmem:[#allocation5] sm:$0xff]
    %v49 = vld [vmem:[#allocation5 + $0x8] sm:$0xff]
    %v50 = vld [vmem:[%s2] sm:$0x1]
    %v52 = vlaneseq
    %v53 = vshrl.u32 %v52, 7
    %v54 = vsub.s32 0, %v53
    %v55 = vrot.slane %v50, %v54
    %vm57 = vcmask 130048
    %v59 = vsel %vm57, %v47, 0
    %61 = vmatprep.subr.mxu0 0.0
    %62 = vmatpush1.msra.mxu0 %v48
    %63 = vmatprep.subr.mxu0 0.0
    %64 = vmatpush1.msra.mxu0 %v49
    %65 = vmatprep.subr.mxu0 0.0
    %66 = vmatpush1.msra.mxu0 0.0
    %67 = vmatprep.subr.mxu0 0.0
    %68 = vmatpush1.msra.mxu0 0.0
    %69 = vmatprep.subr.mxu0 0.0
    %70 = vmatpush1.msra.mxu0 0.0
    %71 = vmatprep.subr.mxu0 0.0
    %72 = vmatpush1.msra.mxu0 0.0
    %73 = vmatprep.subr.mxu0 0.0
    %74 = vmatpush1.msra.mxu0 0.0
    %75 = vmatprep.subr.mxu0 0.0
    %76 = vmatpush1.msra.mxu0 0.0
    %77 = vmatprep.subr.mxu0 0.0
    %78 = vmatpush1.msra.mxu0 0.0
    %79 = vmatprep.subr.mxu0 0.0
    %80 = vmatpush1.msra.mxu0 0.0
    %81 = vmatprep.subr.mxu0 0.0
    %82 = vmatpush1.msra.mxu0 0.0
    %83 = vmatprep.subr.mxu0 0.0
    %84 = vmatpush1.msra.mxu0 0.0
    %85 = vmatprep.subr.mxu0 0.0
    %86 = vmatpush1.msra.mxu0 0.0
    %87 = vmatprep.subr.mxu0 0.0
    %88 = vmatpush1.msra.mxu0 0.0
    %89 = vmatprep.subr.mxu0 0.0
    %90 = vmatpush1.msra.mxu0 0.0
    %91 = vmatprep.subr.mxu0 0.0
    %92 = vmatpush1.msra.mxu0 0.0
    %93 = vmatprep.subr.mxu0 0.0
    %94 = vmatpush1.msra.mxu0 0.0
    %95 = vmatprep.subr.mxu0 0.0
    %96 = vmatpush1.msra.mxu0 0.0
    %97 = vmatprep.subr.mxu0 0.0
    %98 = vmatpush1.msra.mxu0 0.0
    %99 = vmatprep.subr.mxu0 0.0
    %100 = vmatpush1.msra.mxu0 0.0
    %101 = vmatprep.subr.mxu0 0.0
    %102 = vmatpush1.msra.mxu0 0.0
    %103 = vmatprep.subr.mxu0 0.0
    %104 = vmatpush1.msra.mxu0 0.0
    %105 = vmatprep.subr.mxu0 0.0
    %106 = vmatpush1.msra.mxu0 0.0
    %107 = vmatprep.subr.mxu0 0.0
    %108 = vmatpush1.msra.mxu0 0.0
    %109 = vmatprep.subr.mxu0 0.0
    %110 = vmatpush1.msra.mxu0 0.0
    %111 = vmatprep.subr.mxu0 0.0
    %112 = vmatpush1.msra.mxu0 0.0
    %113 = vmatprep.subr.mxu0 0.0
    %114 = vmatpush1.msra.mxu0 0.0
    %115 = vmatprep.subr.mxu0 0.0
    %116 = vmatpush1.msra.mxu0 0.0
    %117 = vmatprep.subr.mxu0 0.0
    %118 = vmatpush1.msra.mxu0 0.0
    %119 = vmatprep.subr.mxu0 0.0
    %120 = vmatpush1.msra.mxu0 0.0
    %121 = vmatprep.subr.mxu0 0.0
    %122 = vmatpush1.msra.mxu0 0.0
    %123 = vmatprep.subr.mxu0 0.0
    %124 = vmatpush1.msra.mxu0 0.0
    %125 = vmatprep.mubr.f32.mxu0 0.0
    %126 = vmatmul.mubr.f32.gmra.mrb[0].mxu0 %v59
    %v127 = vpop.f32.mrb[0].mxu0
    %v128 = vadd.f32 %v55, %v127
    %v129 = vpop.f32.mrb[0].mxu0
    %130 = vdwg.mxu0
    %v131 = vmax.f32 %v128, 0.0
    %v132 = vld [vmem:[%s3] sm:$0x1]
    %v134 = vlaneseq
    %v135 = vshrl.u32 %v134, 7
    %v136 = vsub.s32 0, %v135
    %v137 = vrot.slane %v132, %v136
    %v139 = vmul.f32 %v131, %v137
    %vm140 = vcmask 1045504
    %v141 = vsel %vm140, %v139, 0.0
    %142 = vadd.xlane.f32.xlu0 %v141
    %v143 = vpop.xlane.xlu0 %142
    %s144 = sld [smem:[#allocation2]]
    %v145 = vstv %s144
    %v146 = vadd.f32 %v143, %v145
    %vm147 = vcmask 5120
    %148 = vst.msk [vmem:[%s5] sm:$0x3f] %vm147, %v146
    // Predicated region
    $region30: #{tpu_custom_call.1} parent=1 // pred_check
      _
    $region31: #{tpu_custom_call.1} parent=1 // pred_check_branch
      %150 = sbr.rel (0) target = $region33
    $region32: #{tpu_custom_call.1} parent=1 // pred_region
      _
    $region33: #{tpu_custom_call.1} parent=1 // pred_fallthru
      _
    // Predicated region
    $region34: #{tpu_custom_call.1} parent=1 // pred_check
      _
    $region35: #{tpu_custom_call.1} parent=1 // pred_check_branch
      %152 = sbr.rel (0) target = $region37
    $region36: #{tpu_custom_call.1} parent=1 // pred_region
      _
    $region37: #{tpu_custom_call.1} parent=1 // pred_fallthru
      _
    %153 = vsyncpa [#allocation4], 1
    %154 = vsyncpa [#allocation6], 1

</llo_original>
